<compile_context>
chip_gen: v5e
topology: v5e:2x2
jax: 0.10.0
libtpu: 0.0.40
codegen_flags: <defaults>
</compile_context>

<pallas_src>
import functools
import math

import jax
import jax.numpy as jnp
from jax.experimental import pallas as pl
from jax.experimental.pallas import tpu as pltpu

_LN_EPS = 1e-5
_NEG_INF = -1000000000.0   # matches masked_fill(-1e9) in the PyTorch module


# ----------------------------- tiling helpers -------------------------------
def _chip_kind():
    try:
        return jax.devices()[0].device_kind.lower()
    except Exception:
        return ""


def _fit_tile(S, pref, lane):
    """Largest power-of-two tile <= pref dividing S (or S itself as fallback)."""
    if S <= pref:
        return S
    floor = 128 if lane else 8
    t = pref
    while t >= floor and S % t:
        t //= 2
    if t < floor or S % t:
        return S                      # untiled along this axis (always legal)
    return t


def _pick_tiles(B, S):
    kind = _chip_kind()
    if "v5 lite" in kind or "v5e" in kind or "v5lite" in kind:
        tq_pref, tk_pref = 512, 128   # 128-deep MXU, lowest HBM BW -> big tq
    elif "v7" in kind:
        tq_pref, tk_pref = 256, 256   # 256-deep MXU, 64 MiB VMEM / TC
    elif "v6" in kind:
        tq_pref, tk_pref = 512, 256   # 256-deep MXU, 128 MiB VMEM
    else:
        tq_pref, tk_pref = 256, 256
    tq = _fit_tile(S, tq_pref, lane=False)
    tk = _fit_tile(S, tk_pref, lane=True)
    if "v7" in kind:
        # keep >= 2 parallel grid points so both v7x TensorCores get work
        while (B * (S // tq) < 2 and tq >= 16
               and S % (tq // 2) == 0 and (tq // 2) % 8 == 0):
            tq //= 2
    return tq, tk


def _vmem_limit(block_bytes):
    total = int(block_bytes) + (8 << 20)      # margin for compiler scratch
    return int(min(max(total, 16 << 20), 48 << 20))


# ---------------------------------------------------------------------------
# Kernel 1: LayerNorm + (optionally fused QKV) projection, head-major output.
#   out[o][0, h, :, :] = (LN(x) @ W)[:, o*D + h*hd : o*D + (h+1)*hd]
# ---------------------------------------------------------------------------
def _ln_proj_heads_kernel(H, hd, x_ref, gamma_ref, beta_ref, w_ref, b_ref,
                          *out_refs):
    x = x_ref[0].astype(jnp.float32)                       # (TS, D)
    mu = jnp.mean(x, axis=-1, keepdims=True)
    xc = x - mu
    var = jnp.mean(xc * xc, axis=-1, keepdims=True)        # two-pass variance
    xn = xc * jax.lax.rsqrt(var + _LN_EPS) * gamma_ref[...] + beta_ref[...]
    proj = (jnp.dot(xn.astype(w_ref.dtype), w_ref[...],
                    preferred_element_type=jnp.float32)
            + b_ref[...])                                   # (TS, n_out*D) f32
    D = H * hd
    for o_idx, o_ref in enumerate(out_refs):                # static epilogue
        base = o_idx * D
        for h in range(H):
            o_ref[0, h] = proj[:, base + h * hd: base + (h + 1) * hd].astype(
                o_ref.dtype)


# ---------------------------------------------------------------------------
# Kernel 2a: flash-style TAG attention with fused output projection.
# grid (B, q_tiles, kv_tiles); online softmax scratch; head-batched
# dot_generals; additive (relation + mask) bias shared by all heads;
# 1/sqrt(hd) already folded into Q.
# ---------------------------------------------------------------------------
def _flash_tag_attn_kernel(H, hd, approx_recip,
                           q_ref, k_ref, v_ref, bias_ref, wo_ref, bo_ref,
                           o_ref, m_sc, l_sc, acc_sc):
    ki = pl.program_id(2)

    @pl.when(ki == 0)
    def _():
        m_sc[...] = jnp.full(m_sc.shape, -jnp.inf, jnp.float32)
        l_sc[...] = jnp.zeros(l_sc.shape, jnp.float32)
        acc_sc[...] = jnp.zeros(acc_sc.shape, jnp.float32)

    q = q_ref[0]                                            # (H, TQ, hd)
    k = k_ref[0]                                            # (H, TK, hd)
    v = v_ref[0]                                            # (H, TK, hd)
    bias = bias_ref[0].astype(jnp.float32)                  # (TQ,TK) or (1,TK)

    s = jax.lax.dot_general(q, k, (((2,), (2,)), ((0,), (0,))),
                            preferred_element_type=jnp.float32)  # (H,TQ,TK)
    s = s + bias[None]

    m_prev = m_sc[...]
    m_new = jnp.maximum(m_prev, jnp.max(s, axis=-1, keepdims=True))
    alpha = jnp.exp(m_prev - m_new)
    p = jnp.exp(s - m_new)
    l_sc[...] = alpha * l_sc[...] + jnp.sum(p, axis=-1, keepdims=True)
    pv = jax.lax.dot_general(p.astype(v.dtype), v, (((2,), (1,)), ((0,), (0,))),
                             preferred_element_type=jnp.float32)
    acc_sc[...] = alpha * acc_sc[...] + pv
    m_sc[...] = m_new

    @pl.when(ki == pl.num_programs(2) - 1)
    def _():
        inv_l = pl.reciprocal(l_sc[...], approx=approx_recip)   # (H, TQ, 1)
        ctx = acc_sc[...] * inv_l                               # (H, TQ, hd) f32
        res = bo_ref[...].astype(jnp.float32)                   # (1, D)
        for h in range(H):   # merged-head output projection, head-blocked MXU
            res = res + jnp.dot(ctx[h].astype(wo_ref.dtype), wo_ref[h],
                                preferred_element_type=jnp.float32)
        o_ref[0] = res.astype(o_ref.dtype)                      # (TQ, D) lane-dense


# ---------------------------------------------------------------------------
# Kernel 2b: attention that also emits the probabilities (return_attn=True,
# debug/inspection path). Whole KV row per q tile, exact softmax.
# ---------------------------------------------------------------------------
def _tag_attn_probs_kernel(H, hd, q_ref, k_ref, v_ref, bias_ref, wo_ref, bo_ref,
                           o_ref, attn_ref):
    q = q_ref[0]
    k = k_ref[0]
    v = v_ref[0]
    bias = bias_ref[0].astype(jnp.float32)
    s = jax.lax.dot_general(q, k, (((2,), (2,)), ((0,), (0,))),
                            preferred_element_type=jnp.float32)
    s = s + bias[None]
    m = jnp.max(s, axis=-1, keepdims=True)
    e = jnp.exp(s - m)
    p = e * pl.reciprocal(jnp.sum(e, axis=-1, keepdims=True), approx=False)
    attn_ref[0] = p.astype(attn_ref.dtype)
    ctx = jax.lax.dot_general(p.astype(v.dtype), v, (((2,), (1,)), ((0,), (0,))),
                              preferred_element_type=jnp.float32)   # (H,TQ,hd)
    res = bo_ref[...].astype(jnp.float32)
    for h in range(H):
        res = res + jnp.dot(ctx[h].astype(wo_ref.dtype), wo_ref[h],
                            preferred_element_type=jnp.float32)
    o_ref[0] = res.astype(o_ref.dtype)


# ---------------------------------------------------------------------------
# Wrapper
# ---------------------------------------------------------------------------
def enhanced_tag_attention(query, key, value, mask, tag_relations, params,
                           n_heads, return_attn=False, use_bf16=True):
    """Eval-mode EnhancedTAGAttention.forward -> (output [B,S,D], attn|None)."""
    B, S, D = query.shape
    H = n_heads
    hd = D // H
    assert hd * H == D
    f32 = jnp.float32
    store = jnp.bfloat16 if use_bf16 else jnp.float32
    sb = jnp.dtype(store).itemsize
    scale = 1.0 / math.sqrt(hd)

    tq, tk = _pick_tiles(B, S)
    ts = tq

    # ---- parameter prep (tiny, XLA): fold 1/sqrt(hd) into Q projection,
    #      concatenate [Wq|Wk|Wv], reshape Wo head-blocked -------------------
    gamma = params["gamma"].reshape(1, D).astype(f32)
    beta = params["beta"].reshape(1, D).astype(f32)
    wq = (params["wq_t"].astype(f32) * scale).astype(store)
    bq = (params["bq"].astype(f32) * scale).reshape(1, D)
    wk = params["wk_t"].astype(store)
    bk = params["bk"].reshape(1, D).astype(f32)
    wv = params["wv_t"].astype(store)
    bv = params["bv"].reshape(1, D).astype(f32)
    wo = params["wo_t"].astype(f32).reshape(H, hd, D).astype(store)
    bo = params["bo"].reshape(1, D).astype(f32)

    # ---- additive score bias (relation + mask), shared by all heads --------
    if tag_relations is not None:
        rel_w = jax.nn.softmax(params["rtw"].reshape(-1).astype(f32))
        rel_scale = jax.nn.sigmoid(params["rscale"].reshape(()).astype(f32)) * 0.1
        bias = jnp.einsum("bqkt,t->bqk", tag_relations.astype(f32), rel_w) * rel_scale
        if mask is not None:
            bias = bias + jnp.where(mask.reshape(B, 1, S) == 0.0, _NEG_INF, 0.0)
        bias = bias.astype(store)          # (B, S, S)
        bias_full = True
    else:
        if mask is not None:
            bias = jnp.where(mask.reshape(B, 1, S) == 0.0, _NEG_INF, 0.0).astype(f32)
        else:
            bias = jnp.zeros((B, 1, S), f32)
        bias_full = False                  # (B, 1, S), broadcast in-kernel
    bb = jnp.dtype(bias.dtype).itemsize

    # ---- 1) LayerNorm + projection(s), head-major bf16 output --------------
    def ln_proj(x, w, b, n_out):
        nD = n_out * D
        vmem = (2 * ts * D * 4                               # x (f32) x2 buffers
                + 2 * (D * nD * sb + nD * 4)                 # weight + bias
                + 4 * D * 4                                  # gamma/beta
                + n_out * 2 * H * ts * hd * sb)              # outputs x2 buffers
        return pl.pallas_call(
            functools.partial(_ln_proj_heads_kernel, H, hd),
            grid=(B, S // ts),
            in_specs=[
                pl.BlockSpec((1, ts, D), lambda b_, i: (b_, i, 0)),
                pl.BlockSpec((1, D), lambda b_, i: (0, 0)),
                pl.BlockSpec((1, D), lambda b_, i: (0, 0)),
                pl.BlockSpec((D, nD), lambda b_, i: (0, 0)),
                pl.BlockSpec((1, nD), lambda b_, i: (0, 0)),
            ],
            out_specs=tuple(
                pl.BlockSpec((1, H, ts, hd), lambda b_, i: (b_, 0, i, 0))
                for _ in range(n_out)),
            out_shape=tuple(
                jax.ShapeDtypeStruct((B, H, S, hd), store) for _ in range(n_out)),
            compiler_params=pltpu.CompilerParams(
                dimension_semantics=("parallel", "parallel"),
                vmem_limit_bytes=_vmem_limit(vmem)),
        )(x.astype(f32), gamma, beta, w, b)

    if query is key and key is value:
        # Encoder self-attention: one LayerNorm, one (ts,D)x(D,3D) matmul.
        w_qkv = jnp.concatenate([wq, wk, wv], axis=1)
        b_qkv = jnp.concatenate([bq, bk, bv], axis=1)
        qh, kh, vh = ln_proj(query, w_qkv, b_qkv, 3)
    else:
        (qh,) = ln_proj(query, wq, bq, 1)
        (kh,) = ln_proj(key, wk, bk, 1)
        (vh,) = ln_proj(value, wv, bv, 1)

    # ---- 2) TAG attention (+ fused output projection) ----------------------
    if return_attn:
        # TODO(synk): tile the KV axis of this debug path for very long S on
        #             v7x (64 MiB VMEM); it holds full K/V rows per q tile.
        bias_spec = (pl.BlockSpec((1, tq, S), lambda b_, qi: (b_, qi, 0))
                     if bias_full else
                     pl.BlockSpec((1, 1, S), lambda b_, qi: (b_, 0, 0)))
        vmem = (2 * (H * tq * hd + 2 * H * S * hd) * sb
                + 2 * (tq if bias_full else 1) * S * bb
                + 2 * (H * hd * D * sb + D * 4)
                + 2 * tq * D * 4 + 2 * H * tq * S * 4)
        out, attn = pl.pallas_call(
            functools.partial(_tag_attn_probs_kernel, H, hd),
            grid=(B, S // tq),
            in_specs=[
                pl.BlockSpec((1, H, tq, hd), lambda b_, qi: (b_, 0, qi, 0)),
                pl.BlockSpec((1, H, S, hd), lambda b_, qi: (b_, 0, 0, 0)),
                pl.BlockSpec((1, H, S, hd), lambda b_, qi: (b_, 0, 0, 0)),
                bias_spec,
                pl.BlockSpec((H, hd, D), lambda b_, qi: (0, 0, 0)),
                pl.BlockSpec((1, D), lambda b_, qi: (0, 0)),
            ],
            out_specs=(pl.BlockSpec((1, tq, D), lambda b_, qi: (b_, qi, 0)),
                       pl.BlockSpec((1, H, tq, S), lambda b_, qi: (b_, 0, qi, 0))),
            out_shape=(jax.ShapeDtypeStruct((B, S, D), f32),
                       jax.ShapeDtypeStruct((B, H, S, S), f32)),
            compiler_params=pltpu.CompilerParams(
                dimension_semantics=("parallel", "parallel"),
                vmem_limit_bytes=_vmem_limit(vmem)),
        )(qh, kh, vh, bias, wo, bo)
        return out, attn

    bias_spec = (pl.BlockSpec((1, tq, tk), lambda b_, qi, ki: (b_, qi, ki))
                 if bias_full else
                 pl.BlockSpec((1, 1, tk), lambda b_, qi, ki: (b_, 0, ki)))
    vmem = (2 * (H * tq * hd + 2 * H * tk * hd) * sb
            + 2 * (tq if bias_full else 1) * tk * bb
            + 2 * (H * hd * D * sb + D * 4)
            + 2 * tq * D * 4
            + (2 * H * tq + H * tq * hd) * 4)
    out = pl.pallas_call(
        functools.partial(_flash_tag_attn_kernel, H, hd, use_bf16),
        grid=(B, S // tq, S // tk),
        in_specs=[
            pl.BlockSpec((1, H, tq, hd), lambda b_, qi, ki: (b_, 0, qi, 0)),
            pl.BlockSpec((1, H, tk, hd), lambda b_, qi, ki: (b_, 0, ki, 0)),
            pl.BlockSpec((1, H, tk, hd), lambda b_, qi, ki: (b_, 0, ki, 0)),
            bias_spec,
            pl.BlockSpec((H, hd, D), lambda b_, qi, ki: (0, 0, 0)),
            pl.BlockSpec((1, D), lambda b_, qi, ki: (0, 0)),
        ],
        out_specs=pl.BlockSpec((1, tq, D), lambda b_, qi, ki: (b_, qi, 0)),
        out_shape=jax.ShapeDtypeStruct((B, S, D), f32),
        scratch_shapes=[pltpu.VMEM((H, tq, 1), jnp.float32),
                        pltpu.VMEM((H, tq, 1), jnp.float32),
                        pltpu.VMEM((H, tq, hd), jnp.float32)],
        compiler_params=pltpu.CompilerParams(
            dimension_semantics=("parallel", "parallel", "arbitrary"),
            vmem_limit_bytes=_vmem_limit(vmem)),
    )(qh, kh, vh, bias, wo, bo)
    # TODO(synk): dropout on attn_weights / output is identity at inference.
    return out, None


# ---------------------------------------------------------------------------
# Pure-JAX reference mirroring the PyTorch forward (eval mode)
# ---------------------------------------------------------------------------
def ref_forward(q, k, v, mask, rel, params, n_heads):
    B, S, D = q.shape
    hd = D // n_heads
    gamma = params["gamma"].reshape(1, D)
    beta = params["beta"].reshape(1, D)

    def ln(x):
        mu = x.mean(-1, keepdims=True)
        var = ((x - mu) ** 2).mean(-1, keepdims=True)
        return (x - mu) / jnp.sqrt(var + _LN_EPS) * gamma + beta

    qp = ln(q) @ params["wq_t"] + params["bq"].reshape(1, D)
    kp = ln(k) @ params["wk_t"] + params["bk"].reshape(1, D)
    vp = ln(v) @ params["wv_t"] + params["bv"].reshape(1, D)

    def split(x):
        return x.reshape(B, S, n_heads, hd).transpose(0, 2, 1, 3)

    q4, k4, v4 = split(qp), split(kp), split(vp)
    scores = jnp.einsum("bhqd,bhkd->bhqk", q4, k4) / math.sqrt(hd)
    if rel is not None:
        rw = jax.nn.softmax(params["rtw"].reshape(-1))
        weighted = (rel * rw.reshape(1, 1, 1, -1)).sum(-1)
        scores = scores + weighted[:, None] * jax.nn.sigmoid(
            params["rscale"].reshape(())) * 0.1
    if mask is not None:
        scores = jnp.where(mask == 0, _NEG_INF, scores)
    attn = jax.nn.softmax(scores, -1)
    out = jnp.einsum("bhqk,bhkd->bhqd", attn, v4).transpose(0, 2, 1, 3).reshape(B, S, D)
    out = out @ params["wo_t"] + params["bo"].reshape(1, D)
    return out, attn


if __name__ == "__main__":
    B, S, D, H = 2, 8, 32, 4

    key = jax.random.PRNGKey(0)
    ks = jax.random.split(key, 16)
    x = jax.random.normal(ks[0], (B, S, D), jnp.float32)
    kx = jax.random.normal(ks[1], (B, S, D), jnp.float32)
    vx = jax.random.normal(ks[2], (B, S, D), jnp.float32)
    tag_relations = jax.random.uniform(ks[3], (B, S, S, 4), jnp.float32)
    mask = jnp.ones((B, 1, 1, S), jnp.float32).at[1, 0, 0, 6:].set(0.0)

    # Deterministic synthetic parameters (shapes follow the module's __init__).
    params = {
        "gamma": jnp.ones((D,), jnp.float32),                           # LayerNorm weight
        "beta": jnp.zeros((D,), jnp.float32),                           # LayerNorm bias
        "wq_t": jax.random.normal(ks[4], (D, D), jnp.float32) * 0.05,
        "bq": jax.random.normal(ks[5], (D,), jnp.float32) * 0.02,
        "wk_t": jax.random.normal(ks[6], (D, D), jnp.float32) * 0.05,
        "bk": jax.random.normal(ks[7], (D,), jnp.float32) * 0.02,
        "wv_t": jax.random.normal(ks[8], (D, D), jnp.float32) * 0.05,
        "bv": jax.random.normal(ks[9], (D,), jnp.float32) * 0.02,
        "wo_t": jax.random.normal(ks[10], (D, D), jnp.float32) * 0.05,
        "bo": jax.random.normal(ks[11], (D,), jnp.float32) * 0.02,
        "rtw": jax.random.normal(ks[12], (4,), jnp.float32) * 0.02,     # relation_type_weights
        "rscale": jnp.array(1.0, jnp.float32),                          # relation_scale
    }
    # Note: tag_biases (n_heads,1,1) is declared in the module but unused in forward.

    def check(name, got, want, tol):
        assert got.shape == want.shape, (name, got.shape, want.shape)
        ok = jnp.allclose(got, want, atol=tol, rtol=tol)
        err = float(jnp.max(jnp.abs(got - want)))
        assert bool(ok), f"{name} mismatch (max abs err {err:.3e})"

    # 1) Encoder self-attention (query is key is value): fused LN+QKV,
    #    flash attention, bf16 MXU / bf16 storage (fast path).
    ref_out, ref_attn = ref_forward(x, x, x, mask, tag_relations, params, H)
    out_bf16, a_none = enhanced_tag_attention(
        x, x, x, mask, tag_relations, params, H, return_attn=False, use_bf16=True)
    assert a_none is None
    check("self-attn bf16", out_bf16, ref_out, 2e-2)

    # 2) Same path in f32 (tight parity with the PyTorch reference).
    out_f32, _ = enhanced_tag_attention(
        x, x, x, mask, tag_relations, params, H, return_attn=False, use_bf16=False)
    check("self-attn f32", out_f32, ref_out, 2e-3)

    # 3) Distinct q/k/v + attention probabilities (debug path), f32.
    ref_out2, ref_attn2 = ref_forward(x, kx, vx, mask, tag_relations, params, H)
    out_p, attn_p = enhanced_tag_attention(
        x, kx, vx, mask, tag_relations, params, H, return_attn=True, use_bf16=False)
    check("probs-path out", out_p, ref_out2, 2e-3)
    check("probs-path attn", attn_p, ref_attn2, 2e-3)

    # 4) Mask-only bias path (tag_relations=None), bf16 flash.
    ref_out3, _ = ref_forward(x, kx, vx, mask, None, params, H)
    out_m, _ = enhanced_tag_attention(
        x, kx, vx, mask, None, params, H, return_attn=False, use_bf16=True)
    check("mask-only bf16", out_m, ref_out3, 2e-2)

    jax.block_until_ready((out_bf16, out_f32, out_p, attn_p, out_m))
    print("KERNEL_OK")
</pallas_src>

<mosaic_0001>
module attributes {stable_mosaic.version = 11 : i64} {
  func.func @_ln_proj_heads_kernel(%arg0: i32, %arg1: i32, %arg2: memref<1x8x32xf32, #tpu.memory_space<vmem>>, %arg3: memref<1x32xf32, #tpu.memory_space<vmem>>, %arg4: memref<1x32xf32, #tpu.memory_space<vmem>>, %arg5: memref<32x96xbf16, #tpu.memory_space<vmem>>, %arg6: memref<1x96xf32, #tpu.memory_space<vmem>>, %arg7: memref<1x4x8x8xbf16, #tpu.memory_space<vmem>>, %arg8: memref<1x4x8x8xbf16, #tpu.memory_space<vmem>>, %arg9: memref<1x4x8x8xbf16, #tpu.memory_space<vmem>>) attributes {dimension_semantics = [#tpu.dimension_semantics<parallel>, #tpu.dimension_semantics<parallel>], iteration_bounds = array<i64: 2, 1>, scalar_prefetch = 0 : i64, scratch_operands = 0 : i64, tpu.core_type = #tpu.core_type<tc>, window_params = [{transform_indices = @transform_0, window_bounds = array<i64: 1, 8, 32>}, {pipeline_mode = #tpu.pipeline_mode<synchronous>, transform_indices = @transform_1, window_bounds = array<i64: 1, 32>}, {pipeline_mode = #tpu.pipeline_mode<synchronous>, transform_indices = @transform_2, window_bounds = array<i64: 1, 32>}, {pipeline_mode = #tpu.pipeline_mode<synchronous>, transform_indices = @transform_3, window_bounds = array<i64: 32, 96>}, {pipeline_mode = #tpu.pipeline_mode<synchronous>, transform_indices = @transform_4, window_bounds = array<i64: 1, 96>}, {transform_indices = @transform_5, window_bounds = array<i64: 1, 4, 8, 8>}, {transform_indices = @transform_6, window_bounds = array<i64: 1, 4, 8, 8>}, {transform_indices = @transform_7, window_bounds = array<i64: 1, 4, 8, 8>}]} {
    %c0 = arith.constant 0 : index
    %c0_0 = arith.constant 0 : index
    %c0_1 = arith.constant 0 : index
    %0 = vector.load %arg2[%c0, %c0_0, %c0_1] : memref<1x8x32xf32, #tpu.memory_space<vmem>>, vector<1x8x32xf32>
    %1 = vector.shape_cast %0 : vector<1x8x32xf32> to vector<8x32xf32>
    %cst = arith.constant dense<0.000000e+00> : vector<8xf32>
    %2 = vector.multi_reduction <add>, %1, %cst [1] : vector<8x32xf32> to vector<8xf32>
    %3 = vector.shape_cast %2 : vector<8xf32> to vector<8x1xf32>
    %cst_2 = arith.constant 3.200000e+01 : f32
    %4 = vector.broadcast %cst_2 : f32 to vector<8x1xf32>
    %5 = arith.divf %3, %4 : vector<8x1xf32>
    %6 = vector.broadcast %5 : vector<8x1xf32> to vector<8x32xf32>
    %7 = arith.subf %1, %6 : vector<8x32xf32>
    %8 = arith.mulf %7, %7 : vector<8x32xf32>
    %cst_3 = arith.constant dense<0.000000e+00> : vector<8xf32>
    %9 = vector.multi_reduction <add>, %8, %cst_3 [1] : vector<8x32xf32> to vector<8xf32>
    %10 = vector.shape_cast %9 : vector<8xf32> to vector<8x1xf32>
    %cst_4 = arith.constant 3.200000e+01 : f32
    %11 = vector.broadcast %cst_4 : f32 to vector<8x1xf32>
    %12 = arith.divf %10, %11 : vector<8x1xf32>
    %cst_5 = arith.constant 9.99999974E-6 : f32
    %13 = vector.broadcast %cst_5 : f32 to vector<8x1xf32>
    %14 = arith.addf %12, %13 : vector<8x1xf32>
    %15 = math.rsqrt %14 : vector<8x1xf32>
    %16 = vector.broadcast %15 : vector<8x1xf32> to vector<8x32xf32>
    %17 = arith.mulf %7, %16 : vector<8x32xf32>
    %c0_6 = arith.constant 0 : index
    %c0_7 = arith.constant 0 : index
    %18 = vector.load %arg3[%c0_6, %c0_7] : memref<1x32xf32, #tpu.memory_space<vmem>>, vector<1x32xf32>
    %19 = vector.broadcast %18 : vector<1x32xf32> to vector<8x32xf32>
    %20 = arith.mulf %17, %19 : vector<8x32xf32>
    %c0_8 = arith.constant 0 : index
    %c0_9 = arith.constant 0 : index
    %21 = vector.load %arg4[%c0_8, %c0_9] : memref<1x32xf32, #tpu.memory_space<vmem>>, vector<1x32xf32>
    %22 = vector.broadcast %21 : vector<1x32xf32> to vector<8x32xf32>
    %23 = arith.addf %20, %22 : vector<8x32xf32>
    %24 = arith.truncf %23 : vector<8x32xf32> to vector<8x32xbf16>
    %c0_10 = arith.constant 0 : index
    %c0_11 = arith.constant 0 : index
    %25 = vector.load %arg5[%c0_10, %c0_11] : memref<32x96xbf16, #tpu.memory_space<vmem>>, vector<32x96xbf16>
    %cst_12 = arith.constant dense<0.000000e+00> : vector<8x96xf32>
    %26 = tpu.matmul %24, %25, %cst_12 {dimension_numbers = #tpu.dot_dimension_numbers<[1], [0], [0], [1], [0, 0, 1, 1], [], []>} : vector<8x32xbf16>, vector<32x96xbf16>, vector<8x96xf32> -> vector<8x96xf32>
    %c0_13 = arith.constant 0 : index
    %c0_14 = arith.constant 0 : index
    %27 = vector.load %arg6[%c0_13, %c0_14] : memref<1x96xf32, #tpu.memory_space<vmem>>, vector<1x96xf32>
    %28 = vector.broadcast %27 : vector<1x96xf32> to vector<8x96xf32>
    %29 = arith.addf %26, %28 : vector<8x96xf32>
    %30 = vector.extract_strided_slice %29 {offsets = [0, 0], sizes = [8, 8], strides = [1, 1]} : vector<8x96xf32> to vector<8x8xf32>
    %31 = arith.truncf %30 : vector<8x8xf32> to vector<8x8xbf16>
    %c0_15 = arith.constant 0 : index
    %c0_16 = arith.constant 0 : index
    %c0_17 = arith.constant 0 : index
    %c0_18 = arith.constant 0 : index
    %32 = vector.load %arg7[%c0_15, %c0_16, %c0_17, %c0_18] : memref<1x4x8x8xbf16, #tpu.memory_space<vmem>>, vector<1x1x8x8xbf16>
    %33 = vector.shape_cast %32 : vector<1x1x8x8xbf16> to vector<8x8xbf16>
    %34 = vector.shape_cast %31 : vector<8x8xbf16> to vector<1x1x8x8xbf16>
    tpu.vector_store %arg7[%c0_15, %c0_16, %c0_17, %c0_18], %34 {strides = array<i32>} : memref<1x4x8x8xbf16, #tpu.memory_space<vmem>>, vector<1x1x8x8xbf16>,
    %35 = vector.extract_strided_slice %29 {offsets = [0, 8], sizes = [8, 8], strides = [1, 1]} : vector<8x96xf32> to vector<8x8xf32>
    %36 = arith.truncf %35 : vector<8x8xf32> to vector<8x8xbf16>
    %c0_19 = arith.constant 0 : index
    %c1 = arith.constant 1 : index
    %c0_20 = arith.constant 0 : index
    %c0_21 = arith.constant 0 : index
    %37 = vector.load %arg7[%c0_19, %c1, %c0_20, %c0_21] : memref<1x4x8x8xbf16, #tpu.memory_space<vmem>>, vector<1x1x8x8xbf16>
    %38 = vector.shape_cast %37 : vector<1x1x8x8xbf16> to vector<8x8xbf16>
    %39 = vector.shape_cast %36 : vector<8x8xbf16> to vector<1x1x8x8xbf16>
    tpu.vector_store %arg7[%c0_19, %c1, %c0_20, %c0_21], %39 {strides = array<i32>} : memref<1x4x8x8xbf16, #tpu.memory_space<vmem>>, vector<1x1x8x8xbf16>,
    %40 = vector.extract_strided_slice %29 {offsets = [0, 16], sizes = [8, 8], strides = [1, 1]} : vector<8x96xf32> to vector<8x8xf32>
    %41 = arith.truncf %40 : vector<8x8xf32> to vector<8x8xbf16>
    %c0_22 = arith.constant 0 : index
    %c2 = arith.constant 2 : index
    %c0_23 = arith.constant 0 : index
    %c0_24 = arith.constant 0 : index
    %42 = vector.load %arg7[%c0_22, %c2, %c0_23, %c0_24] : memref<1x4x8x8xbf16, #tpu.memory_space<vmem>>, vector<1x1x8x8xbf16>
    %43 = vector.shape_cast %42 : vector<1x1x8x8xbf16> to vector<8x8xbf16>
    %44 = vector.shape_cast %41 : vector<8x8xbf16> to vector<1x1x8x8xbf16>
    tpu.vector_store %arg7[%c0_22, %c2, %c0_23, %c0_24], %44 {strides = array<i32>} : memref<1x4x8x8xbf16, #tpu.memory_space<vmem>>, vector<1x1x8x8xbf16>,
    %45 = vector.extract_strided_slice %29 {offsets = [0, 24], sizes = [8, 8], strides = [1, 1]} : vector<8x96xf32> to vector<8x8xf32>
    %46 = arith.truncf %45 : vector<8x8xf32> to vector<8x8xbf16>
    %c0_25 = arith.constant 0 : index
    %c3 = arith.constant 3 : index
    %c0_26 = arith.constant 0 : index
    %c0_27 = arith.constant 0 : index
    %47 = vector.load %arg7[%c0_25, %c3, %c0_26, %c0_27] : memref<1x4x8x8xbf16, #tpu.memory_space<vmem>>, vector<1x1x8x8xbf16>
    %48 = vector.shape_cast %47 : vector<1x1x8x8xbf16> to vector<8x8xbf16>
    %49 = vector.shape_cast %46 : vector<8x8xbf16> to vector<1x1x8x8xbf16>
    tpu.vector_store %arg7[%c0_25, %c3, %c0_26, %c0_27], %49 {strides = array<i32>} : memref<1x4x8x8xbf16, #tpu.memory_space<vmem>>, vector<1x1x8x8xbf16>,
    %50 = vector.extract_strided_slice %29 {offsets = [0, 32], sizes = [8, 8], strides = [1, 1]} : vector<8x96xf32> to vector<8x8xf32>
    %51 = arith.truncf %50 : vector<8x8xf32> to vector<8x8xbf16>
    %c0_28 = arith.constant 0 : index
    %c0_29 = arith.constant 0 : index
    %c0_30 = arith.constant 0 : index
    %c0_31 = arith.constant 0 : index
    %52 = vector.load %arg8[%c0_28, %c0_29, %c0_30, %c0_31] : memref<1x4x8x8xbf16, #tpu.memory_space<vmem>>, vector<1x1x8x8xbf16>
    %53 = vector.shape_cast %52 : vector<1x1x8x8xbf16> to vector<8x8xbf16>
    %54 = vector.shape_cast %51 : vector<8x8xbf16> to vector<1x1x8x8xbf16>
    tpu.vector_store %arg8[%c0_28, %c0_29, %c0_30, %c0_31], %54 {strides = array<i32>} : memref<1x4x8x8xbf16, #tpu.memory_space<vmem>>, vector<1x1x8x8xbf16>,
    %55 = vector.extract_strided_slice %29 {offsets = [0, 40], sizes = [8, 8], strides = [1, 1]} : vector<8x96xf32> to vector<8x8xf32>
    %56 = arith.truncf %55 : vector<8x8xf32> to vector<8x8xbf16>
    %c0_32 = arith.constant 0 : index
    %c1_33 = arith.constant 1 : index
    %c0_34 = arith.constant 0 : index
    %c0_35 = arith.constant 0 : index
    %57 = vector.load %arg8[%c0_32, %c1_33, %c0_34, %c0_35] : memref<1x4x8x8xbf16, #tpu.memory_space<vmem>>, vector<1x1x8x8xbf16>
    %58 = vector.shape_cast %57 : vector<1x1x8x8xbf16> to vector<8x8xbf16>
    %59 = vector.shape_cast %56 : vector<8x8xbf16> to vector<1x1x8x8xbf16>
    tpu.vector_store %arg8[%c0_32, %c1_33, %c0_34, %c0_35], %59 {strides = array<i32>} : memref<1x4x8x8xbf16, #tpu.memory_space<vmem>>, vector<1x1x8x8xbf16>,
    %60 = vector.extract_strided_slice %29 {offsets = [0, 48], sizes = [8, 8], strides = [1, 1]} : vector<8x96xf32> to vector<8x8xf32>
    %61 = arith.truncf %60 : vector<8x8xf32> to vector<8x8xbf16>
    %c0_36 = arith.constant 0 : index
    %c2_37 = arith.constant 2 : index
    %c0_38 = arith.constant 0 : index
    %c0_39 = arith.constant 0 : index
    %62 = vector.load %arg8[%c0_36, %c2_37, %c0_38, %c0_39] : memref<1x4x8x8xbf16, #tpu.memory_space<vmem>>, vector<1x1x8x8xbf16>
    %63 = vector.shape_cast %62 : vector<1x1x8x8xbf16> to vector<8x8xbf16>
    %64 = vector.shape_cast %61 : vector<8x8xbf16> to vector<1x1x8x8xbf16>
    tpu.vector_store %arg8[%c0_36, %c2_37, %c0_38, %c0_39], %64 {strides = array<i32>} : memref<1x4x8x8xbf16, #tpu.memory_space<vmem>>, vector<1x1x8x8xbf16>,
    %65 = vector.extract_strided_slice %29 {offsets = [0, 56], sizes = [8, 8], strides = [1, 1]} : vector<8x96xf32> to vector<8x8xf32>
    %66 = arith.truncf %65 : vector<8x8xf32> to vector<8x8xbf16>
    %c0_40 = arith.constant 0 : index
    %c3_41 = arith.constant 3 : index
    %c0_42 = arith.constant 0 : index
    %c0_43 = arith.constant 0 : index
    %67 = vector.load %arg8[%c0_40, %c3_41, %c0_42, %c0_43] : memref<1x4x8x8xbf16, #tpu.memory_space<vmem>>, vector<1x1x8x8xbf16>
    %68 = vector.shape_cast %67 : vector<1x1x8x8xbf16> to vector<8x8xbf16>
    %69 = vector.shape_cast %66 : vector<8x8xbf16> to vector<1x1x8x8xbf16>
    tpu.vector_store %arg8[%c0_40, %c3_41, %c0_42, %c0_43], %69 {strides = array<i32>} : memref<1x4x8x8xbf16, #tpu.memory_space<vmem>>, vector<1x1x8x8xbf16>,
    %70 = vector.extract_strided_slice %29 {offsets = [0, 64], sizes = [8, 8], strides = [1, 1]} : vector<8x96xf32> to vector<8x8xf32>
    %71 = arith.truncf %70 : vector<8x8xf32> to vector<8x8xbf16>
    %c0_44 = arith.constant 0 : index
    %c0_45 = arith.constant 0 : index
    %c0_46 = arith.constant 0 : index
    %c0_47 = arith.constant 0 : index
    %72 = vector.load %arg9[%c0_44, %c0_45, %c0_46, %c0_47] : memref<1x4x8x8xbf16, #tpu.memory_space<vmem>>, vector<1x1x8x8xbf16>
    %73 = vector.shape_cast %72 : vector<1x1x8x8xbf16> to vector<8x8xbf16>
    %74 = vector.shape_cast %71 : vector<8x8xbf16> to vector<1x1x8x8xbf16>
    tpu.vector_store %arg9[%c0_44, %c0_45, %c0_46, %c0_47], %74 {strides = array<i32>} : memref<1x4x8x8xbf16, #tpu.memory_space<vmem>>, vector<1x1x8x8xbf16>,
    %75 = vector.extract_strided_slice %29 {offsets = [0, 72], sizes = [8, 8], strides = [1, 1]} : vector<8x96xf32> to vector<8x8xf32>
    %76 = arith.truncf %75 : vector<8x8xf32> to vector<8x8xbf16>
    %c0_48 = arith.constant 0 : index
    %c1_49 = arith.constant 1 : index
    %c0_50 = arith.constant 0 : index
    %c0_51 = arith.constant 0 : index
    %77 = vector.load %arg9[%c0_48, %c1_49, %c0_50, %c0_51] : memref<1x4x8x8xbf16, #tpu.memory_space<vmem>>, vector<1x1x8x8xbf16>
    %78 = vector.shape_cast %77 : vector<1x1x8x8xbf16> to vector<8x8xbf16>
    %79 = vector.shape_cast %76 : vector<8x8xbf16> to vector<1x1x8x8xbf16>
    tpu.vector_store %arg9[%c0_48, %c1_49, %c0_50, %c0_51], %79 {strides = array<i32>} : memref<1x4x8x8xbf16, #tpu.memory_space<vmem>>, vector<1x1x8x8xbf16>,
    %80 = vector.extract_strided_slice %29 {offsets = [0, 80], sizes = [8, 8], strides = [1, 1]} : vector<8x96xf32> to vector<8x8xf32>
    %81 = arith.truncf %80 : vector<8x8xf32> to vector<8x8xbf16>
    %c0_52 = arith.constant 0 : index
    %c2_53 = arith.constant 2 : index
    %c0_54 = arith.constant 0 : index
    %c0_55 = arith.constant 0 : index
    %82 = vector.load %arg9[%c0_52, %c2_53, %c0_54, %c0_55] : memref<1x4x8x8xbf16, #tpu.memory_space<vmem>>, vector<1x1x8x8xbf16>
    %83 = vector.shape_cast %82 : vector<1x1x8x8xbf16> to vector<8x8xbf16>
    %84 = vector.shape_cast %81 : vector<8x8xbf16> to vector<1x1x8x8xbf16>
    tpu.vector_store %arg9[%c0_52, %c2_53, %c0_54, %c0_55], %84 {strides = array<i32>} : memref<1x4x8x8xbf16, #tpu.memory_space<vmem>>, vector<1x1x8x8xbf16>,
    %85 = vector.extract_strided_slice %29 {offsets = [0, 88], sizes = [8, 8], strides = [1, 1]} : vector<8x96xf32> to vector<8x8xf32>
    %86 = arith.truncf %85 : vector<8x8xf32> to vector<8x8xbf16>
    %c0_56 = arith.constant 0 : index
    %c3_57 = arith.constant 3 : index
    %c0_58 = arith.constant 0 : index
    %c0_59 = arith.constant 0 : index
    %87 = vector.load %arg9[%c0_56, %c3_57, %c0_58, %c0_59] : memref<1x4x8x8xbf16, #tpu.memory_space<vmem>>, vector<1x1x8x8xbf16>
    %88 = vector.shape_cast %87 : vector<1x1x8x8xbf16> to vector<8x8xbf16>
    %89 = vector.shape_cast %86 : vector<8x8xbf16> to vector<1x1x8x8xbf16>
    tpu.vector_store %arg9[%c0_56, %c3_57, %c0_58, %c0_59], %89 {strides = array<i32>} : memref<1x4x8x8xbf16, #tpu.memory_space<vmem>>, vector<1x1x8x8xbf16>,
    return
  }
  func.func @transform_0(%arg0: i32, %arg1: i32) -> (i32, i32, i32) {
    %c0_i32 = arith.constant 0 : i32
    %c0_i32_0 = arith.constant 0 : i32
    return %arg0, %arg1, %c0_i32 : i32, i32, i32
  }
  func.func @transform_1(%arg0: i32, %arg1: i32) -> (i32, i32) {
    %c0_i32 = arith.constant 0 : i32
    %c0_i32_0 = arith.constant 0 : i32
    %c0_i32_1 = arith.constant 0 : i32
    return %c0_i32, %c0_i32_0 : i32, i32
  }
  func.func @transform_2(%arg0: i32, %arg1: i32) -> (i32, i32) {
    %c0_i32 = arith.constant 0 : i32
    %c0_i32_0 = arith.constant 0 : i32
    %c0_i32_1 = arith.constant 0 : i32
    return %c0_i32, %c0_i32_0 : i32, i32
  }
  func.func @transform_3(%arg0: i32, %arg1: i32) -> (i32, i32) {
    %c0_i32 = arith.constant 0 : i32
    %c0_i32_0 = arith.constant 0 : i32
    %c0_i32_1 = arith.constant 0 : i32
    return %c0_i32, %c0_i32_0 : i32, i32
  }
  func.func @transform_4(%arg0: i32, %arg1: i32) -> (i32, i32) {
    %c0_i32 = arith.constant 0 : i32
    %c0_i32_0 = arith.constant 0 : i32
    %c0_i32_1 = arith.constant 0 : i32
    return %c0_i32, %c0_i32_0 : i32, i32
  }
  func.func @transform_5(%arg0: i32, %arg1: i32) -> (i32, i32, i32, i32) {
    %c0_i32 = arith.constant 0 : i32
    %c0_i32_0 = arith.constant 0 : i32
    %c0_i32_1 = arith.constant 0 : i32
    return %arg0, %c0_i32, %arg1, %c0_i32_0 : i32, i32, i32, i32
  }
  func.func @transform_6(%arg0: i32, %arg1: i32) -> (i32, i32, i32, i32) {
    %c0_i32 = arith.constant 0 : i32
    %c0_i32_0 = arith.constant 0 : i32
    %c0_i32_1 = arith.constant 0 : i32
    return %arg0, %c0_i32, %arg1, %c0_i32_0 : i32, i32, i32, i32
  }
  func.func @transform_7(%arg0: i32, %arg1: i32) -> (i32, i32, i32, i32) {
    %c0_i32 = arith.constant 0 : i32
    %c0_i32_0 = arith.constant 0 : i32
    %c0_i32_1 = arith.constant 0 : i32
    return %arg0, %c0_i32, %arg1, %c0_i32_0 : i32, i32, i32, i32
  }
}

</mosaic_0001>

<llo_original>
// kernel: tpu_custom_call.1
$region0: #{tpu_custom_call.1}
  #allocation0 [shape = 'u32[]', space=smem, size = 0x4, offset = 0x4, fixed_abs, tag = 'smem constant byte address 0x4 - core index']
  #allocation1 [shape = 'u32[72,128]{1,0:T(1,128)}', space=vmem, size = 0x9000, scoped, tag = 'internal scratch']
  %s0 = inlined_call_operand.hbm [shape: f32[2,8,32], index: 0, kind: input, shape index: {}]
  %s1 = inlined_call_operand.hbm [shape: f32[1,32], index: 1, kind: input, shape index: {}]
  %s2 = inlined_call_operand.vmem [shape: f32[1,32], index: 2, kind: input, shape index: {}]
  %s3 = inlined_call_operand.hbm [shape: bf16[32,96], index: 3, kind: input, shape index: {}]
  %s4 = inlined_call_operand.vmem [shape: f32[1,96], index: 4, kind: input, shape index: {}]
  %s5 = inlined_call_operand.hbm [shape: bf16[2,4,8,8], index: 5, kind: output, shape index: {0}]
  %s6 = inlined_call_operand.hbm [shape: bf16[2,4,8,8], index: 6, kind: output, shape index: {1}]
  %s7 = inlined_call_operand.hbm [shape: bf16[2,4,8,8], index: 7, kind: output, shape index: {2}]
  %8 = xla_tuple %s5, %s6, %s7
  %s9 = sld [smem:[#allocation0]]
  $region81: #{tpu_custom_call.1} parent=0
    _
  %s11 = ssub.s32 1, %s9
  %s12 = scalar_select 0, %s11, %s9
  $region1: #{tpu_custom_call.1} parent=0
    #allocation2 [shape = 'u8[8192]{0}', space=vmem, size = 0x2000, scoped, tag = 'input window, operand 0']
    #allocation3 [shape = 's32[2]{0}', space=sflag, size = 0x8, scoped, tag = 'scoped memory for tpu_custom_call.1']
    #allocation4 [shape = 's32[2]{0}', space=sflag, size = 0x8, scoped, tag = 'scoped memory for tpu_custom_call.1']
    #allocation5 [shape = 'u8[512]{0}', space=vmem, size = 0x400, scoped, tag = 'input window, operand 1, single buffered']
    #allocation6 [shape = 's32[1]{0}', space=sflag, size = 0x4, scoped, tag = 'scoped memory for tpu_custom_call.1']
    #allocation7 [shape = 'u8[8192]{0}', space=vmem, size = 0x2000, scoped, tag = 'input window, operand 3, single buffered']
    #allocation8 [shape = 'u8[16384]{0}', space=vmem, size = 0x4000, scoped, tag = 'output window, operand 0']
    #allocation9 [shape = 'u8[16384]{0}', space=vmem, size = 0x4000, scoped, tag = 'output window, operand 1']
    #allocation10 [shape = 's32[2]{0}', space=sflag, size = 0x8, scoped, tag = 'scoped memory for tpu_custom_call.1']
    #allocation11 [shape = 'u8[16384]{0}', space=vmem, size = 0x4000, scoped, tag = 'output window, operand 2']
    %13 = vsyncpa [#allocation3], 0
    %s14 = scalar_lea.sflag [#allocation3], 1
    %15 = vsyncpa %s14, 0
    %16 = vsyncpa [#allocation6], 0
    %17 = vsyncpa [#allocation4], 0
    %s18 = scalar_lea.sflag [#allocation4], 1
    %19 = vsyncpa %s18, 0
    %20 = vsyncpa [#allocation10], 0
    %s21 = scalar_lea.sflag [#allocation10], 1
    %22 = vsyncpa %s21, 0
    loop: start=0, step=1, limit=4
    $region2: #{tpu_custom_call.1} parent=1 // loop_pre_header
      _
    $region3: #{tpu_custom_call.1} parent=1 // loop_header
      %s24 = sphi 0, %s28
      %p25 = scmp.ge.s32.totalorder %s24, 4
      %s31 = sphi 0, %s43
      %s32 = sphi 0, %s39
      %s33 = sphi 0, %s31
      %s34 = sphi 0, %s32
      %s35 = sphi 0, %s33
      %s36 = sphi 0, %s34
      %s48 = sphi 0, %s50
      %s51 = sphi 0, %s48
      %s52 = sphi 0, %s51
      %s68 = sphi 0, %s52
      %s72 = sphi 0, %s72
      %s74 = sphi 0, %s72
      %s75 = sphi 0, %s74
      %s89 = sphi 0, %s75
      %s93 = sphi 0, %s93
      %s95 = sphi 0, %s93
      %s96 = sphi 0, %s95
      %s110 = sphi 0, %s96
      %s114 = sphi 0, %s114
      %s116 = sphi 0, %s114
      %s117 = sphi 0, %s116
      %s131 = sphi 0, %s117
      %s135 = sphi 0, %s135
      %s137 = sphi 0, %s135
      %s138 = sphi 0, %s137
      %s152 = sphi 0, %s138
      %s160 = sphi 0, %s162
      %s163 = sphi 0, %s160
      %s164 = sphi 0, %s163
      %s180 = sphi 0, %s164
      %s188 = sphi 0, %s190
      %s191 = sphi 0, %s188
      %s192 = sphi 0, %s191
      %s208 = sphi 0, %s192
      %s216 = sphi 0, %s218
      %s219 = sphi 0, %s216
      %s220 = sphi 0, %s219
      %s236 = sphi 0, %s220
    $region4: #{tpu_custom_call.1} parent=1 // loop_header_branch
      %27 = sbr.rel (%p25) target = $region8
    $region5: #{tpu_custom_call.1} parent=1 // loop_body
      %s29 = ssub.s32 %s24, 1
      %s30 = ssub.s32 %s24, 2
      %s37 = sadd.s32 1, %s32
      %p38 = scmp.ge.s32.totalorder %s37, 1
      %s39 = scalar_select %p38, 0, %s37
      %s40 = sadd.s32 1, %s31
      %s41 = scalar_select %p38, %s40, %s31
      %p42 = scmp.ge.s32.totalorder %s41, 2
      %s43 = scalar_select %p42, 0, %s41
      %s44 = ssub.s32 %s31, %s43
      %s45 = ssub.s32 %s32, %s39
      %s46 = sor.u32 %s44, %s45
      %p47 = scmp.eq.s32.totalorder %s46, 0
      %s49 = sadd.s32 %s48, 1
      %s50 = scalar_select %p47, %s48, %s49
      %p53 = pneg %p47
      %p54 = scmp.eq.s32.totalorder %s24, 1
      %p55 = por %p53, %p54
      %p56 = scmp.ne.s32.totalorder %s48, %s51
      %p57 = scmp.eq.s32.totalorder %s24, 0
      %p58 = por %p56, %p57
      %p59 = scmp.ne.s32.totalorder %s48, %s51
      %p60 = scmp.eq.s32.totalorder %s29, 1
      %p61 = por %p59, %p60
      %p62 = scmp.ne.s32.totalorder %s51, %s52
      %p63 = scmp.eq.s32.totalorder %s29, 0
      %p64 = por %p62, %p63
      %p65 = scmp.ne.s32.totalorder %s51, %s52
      %p66 = scmp.eq.s32.totalorder %s30, 1
      %p67 = por %p65, %p66
      %p69 = scmp.ne.s32.totalorder %s52, %s68
      %p70 = scmp.eq.s32.totalorder %s30, 0
      %p71 = por %p69, %p70
      %s73 = sadd.s32 %s72, 1
      %p76 = scmp.eq.s32.totalorder %s24, 1
      %p77 = scmp.ne.s32.totalorder %s72, %s74
      %p78 = scmp.eq.s32.totalorder %s24, 0
      %p79 = por %p77, %p78
      %p80 = scmp.ne.s32.totalorder %s72, %s74
      %p81 = scmp.eq.s32.totalorder %s29, 1
      %p82 = por %p80, %p81
      %p83 = scmp.ne.s32.totalorder %s74, %s75
      %p84 = scmp.eq.s32.totalorder %s29, 0
      %p85 = por %p83, %p84
      %p86 = scmp.ne.s32.totalorder %s74, %s75
      %p87 = scmp.eq.s32.totalorder %s30, 1
      %p88 = por %p86, %p87
      %p90 = scmp.ne.s32.totalorder %s75, %s89
      %p91 = scmp.eq.s32.totalorder %s30, 0
      %p92 = por %p90, %p91
      %s94 = sadd.s32 %s93, 1
      %p97 = scmp.eq.s32.totalorder %s24, 1
      %p98 = scmp.ne.s32.totalorder %s93, %s95
      %p99 = scmp.eq.s32.totalorder %s24, 0
      %p100 = por %p98, %p99
      %p101 = scmp.ne.s32.totalorder %s93, %s95
      %p102 = scmp.eq.s32.totalorder %s29, 1
      %p103 = por %p101, %p102
      %p104 = scmp.ne.s32.totalorder %s95, %s96
      %p105 = scmp.eq.s32.totalorder %s29, 0
      %p106 = por %p104, %p105
      %p107 = scmp.ne.s32.totalorder %s95, %s96
      %p108 = scmp.eq.s32.totalorder %s30, 1
      %p109 = por %p107, %p108
      %p111 = scmp.ne.s32.totalorder %s96, %s110
      %p112 = scmp.eq.s32.totalorder %s30, 0
      %p113 = por %p111, %p112
      %s115 = sadd.s32 %s114, 1
      %p118 = scmp.eq.s32.totalorder %s24, 1
      %p119 = scmp.ne.s32.totalorder %s114, %s116
      %p120 = scmp.eq.s32.totalorder %s24, 0
      %p121 = por %p119, %p120
      %p122 = scmp.ne.s32.totalorder %s114, %s116
      %p123 = scmp.eq.s32.totalorder %s29, 1
      %p124 = por %p122, %p123
      %p125 = scmp.ne.s32.totalorder %s116, %s117
      %p126 = scmp.eq.s32.totalorder %s29, 0
      %p127 = por %p125, %p126
      %p128 = scmp.ne.s32.totalorder %s116, %s117
      %p129 = scmp.eq.s32.totalorder %s30, 1
      %p130 = por %p128, %p129
      %p132 = scmp.ne.s32.totalorder %s117, %s131
      %p133 = scmp.eq.s32.totalorder %s30, 0
      %p134 = por %p132, %p133
      %s136 = sadd.s32 %s135, 1
      %p139 = scmp.eq.s32.totalorder %s24, 1
      %p140 = scmp.ne.s32.totalorder %s135, %s137
      %p141 = scmp.eq.s32.totalorder %s24, 0
      %p142 = por %p140, %p141
      %p143 = scmp.ne.s32.totalorder %s135, %s137
      %p144 = scmp.eq.s32.totalorder %s29, 1
      %p145 = por %p143, %p144
      %p146 = scmp.ne.s32.totalorder %s137, %s138
      %p147 = scmp.eq.s32.totalorder %s29, 0
      %p148 = por %p146, %p147
      %p149 = scmp.ne.s32.totalorder %s137, %s138
      %p150 = scmp.eq.s32.totalorder %s30, 1
      %p151 = por %p149, %p150
      %p153 = scmp.ne.s32.totalorder %s138, %s152
      %p154 = scmp.eq.s32.totalorder %s30, 0
      %p155 = por %p153, %p154
      %s156 = ssub.s32 %s31, %s43
      %s157 = ssub.s32 %s32, %s39
      %s158 = sor.u32 %s156, %s157
      %p159 = scmp.eq.s32.totalorder %s158, 0
      %s161 = sadd.s32 %s160, 1
      %s162 = scalar_select %p159, %s160, %s161
      %p165 = pneg %p159
      %p166 = scmp.eq.s32.totalorder %s24, 1
      %p167 = por %p165, %p166
      %p168 = scmp.ne.s32.totalorder %s160, %s163
      %p169 = scmp.eq.s32.totalorder %s24, 0
      %p170 = por %p168, %p169
      %p171 = scmp.ne.s32.totalorder %s160, %s163
      %p172 = scmp.eq.s32.totalorder %s29, 1
      %p173 = por %p171, %p172
      %p174 = scmp.ne.s32.totalorder %s163, %s164
      %p175 = scmp.eq.s32.totalorder %s29, 0
      %p176 = por %p174, %p175
      %p177 = scmp.ne.s32.totalorder %s163, %s164
      %p178 = scmp.eq.s32.totalorder %s30, 1
      %p179 = por %p177, %p178
      %p181 = scmp.ne.s32.totalorder %s164, %s180
      %p182 = scmp.eq.s32.totalorder %s30, 0
      %p183 = por %p181, %p182
      %s184 = ssub.s32 %s31, %s43
      %s185 = ssub.s32 %s32, %s39
      %s186 = sor.u32 %s184, %s185
      %p187 = scmp.eq.s32.totalorder %s186, 0
      %s189 = sadd.s32 %s188, 1
      %s190 = scalar_select %p187, %s188, %s189
      %p193 = pneg %p187
      %p194 = scmp.eq.s32.totalorder %s24, 1
      %p195 = por %p193, %p194
      %p196 = scmp.ne.s32.totalorder %s188, %s191
      %p197 = scmp.eq.s32.totalorder %s24, 0
      %p198 = por %p196, %p197
      %p199 = scmp.ne.s32.totalorder %s188, %s191
      %p200 = scmp.eq.s32.totalorder %s29, 1
      %p201 = por %p199, %p200
      %p202 = scmp.ne.s32.totalorder %s191, %s192
      %p203 = scmp.eq.s32.totalorder %s29, 0
      %p204 = por %p202, %p203
      %p205 = scmp.ne.s32.totalorder %s191, %s192
      %p206 = scmp.eq.s32.totalorder %s30, 1
      %p207 = por %p205, %p206
      %p209 = scmp.ne.s32.totalorder %s192, %s208
      %p210 = scmp.eq.s32.totalorder %s30, 0
      %p211 = por %p209, %p210
      %s212 = ssub.s32 %s31, %s43
      %s213 = ssub.s32 %s32, %s39
      %s214 = sor.u32 %s212, %s213
      %p215 = scmp.eq.s32.totalorder %s214, 0
      %s217 = sadd.s32 %s216, 1
      %s218 = scalar_select %p215, %s216, %s217
      %p221 = pneg %p215
      %p222 = scmp.eq.s32.totalorder %s24, 1
      %p223 = por %p221, %p222
      %p224 = scmp.ne.s32.totalorder %s216, %s219
      %p225 = scmp.eq.s32.totalorder %s24, 0
      %p226 = por %p224, %p225
      %p227 = scmp.ne.s32.totalorder %s216, %s219
      %p228 = scmp.eq.s32.totalorder %s29, 1
      %p229 = por %p227, %p228
      %p230 = scmp.ne.s32.totalorder %s219, %s220
      %p231 = scmp.eq.s32.totalorder %s29, 0
      %p232 = por %p230, %p231
      %p233 = scmp.ne.s32.totalorder %s219, %s220
      %p234 = scmp.eq.s32.totalorder %s30, 1
      %p235 = por %p233, %p234
      %p237 = scmp.ne.s32.totalorder %s220, %s236
      %p238 = scmp.eq.s32.totalorder %s30, 0
      %p239 = por %p237, %p238
      %p240 = scmp.le.s32.totalorder 1, %s24
      %p241 = scmp.lt.s32.totalorder %s24, 3
      %p242 = pnand %p240, %p241
      %p243 = pneg %p242
      // Predicated region
      $region9: #{tpu_custom_call.1} parent=5 // pred_check
        _
      $region10: #{tpu_custom_call.1} parent=5 // pred_check_branch
        %245 = sbr.rel (%p242) target = $region12
      $region11: #{tpu_custom_call.1} parent=5 // pred_region
        %s246 = ssub.s32 %s24, 1
        // Predicated region
        $region13: #{tpu_custom_call.1} parent=11 // pred_check
          %p247 = pneg %p85
        $region14: #{tpu_custom_call.1} parent=11 // pred_check_branch
          %249 = sbr.rel (%p247) target = $region16
        $region15: #{tpu_custom_call.1} parent=11 // pred_region
          %251 = vsyncadd [#allocation6], 0
          %s253 = sshll.u32 %s1, 4
          %s254 = int_to_ptr.hbm [resolvable:$true] %s253
          %s255 = sshll.u32 [#allocation5], 4
          %s256 = int_to_ptr.vmem [resolvable:$true] %s255
          %258 = dma.hbm_to_vmem [thread:$0]  %s254, 16, %s256, [#allocation6]
        $region16: #{tpu_custom_call.1} parent=11 // pred_fallthru
          _
        // Predicated region
        $region17: #{tpu_custom_call.1} parent=11 // pred_check
          %p259 = pneg %p106
        $region18: #{tpu_custom_call.1} parent=11 // pred_check_branch
          %261 = sbr.rel (%p259) target = $region20
        $region19: #{tpu_custom_call.1} parent=11 // pred_region
          _
        $region20: #{tpu_custom_call.1} parent=11 // pred_fallthru
          _
        // Predicated region
        $region21: #{tpu_custom_call.1} parent=11 // pred_check
          %p262 = pneg %p127
        $region22: #{tpu_custom_call.1} parent=11 // pred_check_branch
          %264 = sbr.rel (%p262) target = $region24
        $region23: #{tpu_custom_call.1} parent=11 // pred_region
          %266 = vsyncadd [#allocation6], 0
          %s267 = sshll.u32 %s3, 4
          %s268 = int_to_ptr.hbm [resolvable:$true] %s267
          %s269 = sshll.u32 [#allocation7], 4
          %s270 = int_to_ptr.vmem [resolvable:$true] %s269
          %275 = dma.hbm_to_vmem [thread:$0]  %s268, 256, %s270, [#allocation6], 64, 64, 4
        $region24: #{tpu_custom_call.1} parent=11 // pred_fallthru
          _
        // Predicated region
        $region25: #{tpu_custom_call.1} parent=11 // pred_check
          %p276 = pneg %p148
        $region26: #{tpu_custom_call.1} parent=11 // pred_check_branch
          %278 = sbr.rel (%p276) target = $region28
        $region27: #{tpu_custom_call.1} parent=11 // pred_region
          _
        $region28: #{tpu_custom_call.1} parent=11 // pred_fallthru
          _
      $region12: #{tpu_custom_call.1} parent=5 // pred_fallthru
        _
      %p279 = scmp.lt.s32.totalorder %s24, 2
      // Predicated region
      $region29: #{tpu_custom_call.1} parent=5 // pred_check
        %p280 = pneg %p279
      $region30: #{tpu_custom_call.1} parent=5 // pred_check_branch
        %282 = sbr.rel (%p280) target = $region32
      $region31: #{tpu_custom_call.1} parent=5 // pred_region
        // Predicated region
        $region33: #{tpu_custom_call.1} parent=31 // pred_check
          %p283 = pneg %p58
        $region34: #{tpu_custom_call.1} parent=31 // pred_check_branch
          %285 = sbr.rel (%p283) target = $region36
        $region35: #{tpu_custom_call.1} parent=31 // pred_region
          %s286 = sand.u32 %s48, 1
          %s287 = scalar_lea.sflag [#allocation3], %s286
          %s288 = sand.u32 %s48, 1
          %s289 = smul.addr %s288, 8
          %s290 = scalar_lea.vmem [#allocation2], %s289
          %292 = vsyncadd %s287, 0
          %s293 = sadd.s32 %s32, %s31
          %s294 = smul.addr %s293, 8
          %s295 = scalar_lea.hbm %s0, %s294
          %s297 = sshll.u32 %s295, 4
          %s298 = int_to_ptr.hbm [resolvable:$true] %s297
          %s299 = sshll.u32 %s290, 4
          %s300 = int_to_ptr.vmem [resolvable:$true] %s299
          %302 = dma.hbm_to_vmem [thread:$0]  %s298, 128, %s300, %s287
        $region36: #{tpu_custom_call.1} parent=31 // pred_fallthru
          _
      $region32: #{tpu_custom_call.1} parent=5 // pred_fallthru
        _
      %p303 = scmp.le.s32.totalorder 1, %s24
      %p304 = scmp.lt.s32.totalorder %s24, 3
      %p305 = pnand %p303, %p304
      %p306 = pneg %p305
      // Predicated region
      $region37: #{tpu_custom_call.1} parent=5 // pred_check
        _
      $region38: #{tpu_custom_call.1} parent=5 // pred_check_branch
        %308 = sbr.rel (%p305) target = $region40
      $region39: #{tpu_custom_call.1} parent=5 // pred_region
        %s309 = ssub.s32 %s24, 1
        %s310 = sand.u32 %s51, 1
        %s311 = scalar_lea.sflag [#allocation3], %s310
        %s312 = sand.u32 %s51, 1
        %s313 = smul.addr %s312, 8
        %s314 = scalar_lea.vmem [#allocation2], %s313
        // Predicated region
        $region41: #{tpu_custom_call.1} parent=39 // pred_check
          %p315 = pneg %p64
        $region42: #{tpu_custom_call.1} parent=39 // pred_check_branch
          %317 = sbr.rel (%p315) target = $region44
        $region43: #{tpu_custom_call.1} parent=39 // pred_region
          %319 = dma.done %s311, 128
        $region44: #{tpu_custom_call.1} parent=39 // pred_fallthru
          _
        // Predicated region
        $region45: #{tpu_custom_call.1} parent=39 // pred_check
          %p320 = pneg %p85
        $region46: #{tpu_custom_call.1} parent=39 // pred_check_branch
          %322 = sbr.rel (%p320) target = $region48
        $region47: #{tpu_custom_call.1} parent=39 // pred_region
          %324 = dma.done [#allocation6], 16
        $region48: #{tpu_custom_call.1} parent=39 // pred_fallthru
          _
        // Predicated region
        $region49: #{tpu_custom_call.1} parent=39 // pred_check
          %p325 = pneg %p127
        $region50: #{tpu_custom_call.1} parent=39 // pred_check_branch
          %327 = sbr.rel (%p325) target = $region52
        $region51: #{tpu_custom_call.1} parent=39 // pred_region
          %329 = dma.done [#allocation6], 256
        $region52: #{tpu_custom_call.1} parent=39 // pred_fallthru
          _
        %s330 = sand.u32 %s51, 1
        %s331 = scalar_lea.sflag [#allocation3], %s330
        %s332 = sand.u32 %s51, 1
        %s333 = smul.addr %s332, 8
        %s334 = scalar_lea.vmem [#allocation2], %s333
        %p335 = pneg %p64
        %p336 = pneg %p61
        %p337 = pneg %p85
        %p338 = pneg %p82
        %p339 = pneg %p106
        %p340 = pneg %p103
        %p341 = pneg %p127
        %p342 = pneg %p124
        %p343 = pneg %p148
        %p344 = pneg %p145
        %p345 = pneg %p176
        %p346 = pneg %p173
        %s347 = sand.u32 %s163, 1
        %s348 = scalar_lea.sflag [#allocation4], %s347
        %s349 = sand.u32 %s163, 1
        %s350 = smul.addr %s349, 16
        %s351 = scalar_lea.vmem [#allocation8], %s350
        %p352 = pneg %p204
        %p353 = pneg %p201
        %s354 = sand.u32 %s29, 1
        %s355 = scalar_lea.sflag [#allocation10], %s354
        %s356 = sand.u32 %s191, 1
        %s357 = smul.addr %s356, 16
        %s358 = scalar_lea.vmem [#allocation9], %s357
        %p359 = pneg %p232
        %p360 = pneg %p229
        %s361 = sand.u32 %s29, 1
        %s362 = scalar_lea.sflag [#allocation10], %s361
        %s363 = sand.u32 %s219, 1
        %s364 = smul.addr %s363, 16
        %s365 = scalar_lea.vmem [#allocation11], %s364
        %v367 = vld [vmem:[%s314] sm:$0xff]
        %vm368 = vcmask 261120
        %v369 = vsel %vm368, %v367, 0.0
        %370 = vadd.xlane.f32.xlu0 %v369
        %v371 = vpop.xlane.xlu0 %370
        %v372 = vrcp.pop 32.0
        %v373 = vmul.f32 32.0, %v372
        %v374 = vsub.f32 1.0, %v373
        %v375 = vmul.f32 %v372, %v374
        %v376 = vadd.f32 %v372, %v375
        %vm377 = vweird.f32 %v372
        %v378 = vsel %vm377, %v372, %v376
        %v379 = vmul.f32 %v371, %v378
        %v380 = vsub.f32 %v367, %v379
        %v381 = vmul.f32 %v380, %v380
        %v382 = vsel %vm368, %v381, 0.0
        %383 = vadd.xlane.f32.xlu0 %v382
        %v384 = vpop.xlane.xlu0 %383
        %v385 = vmul.f32 %v384, %v378
        %v386 = vadd.f32 %v385, 1e-05
        %v387 = vrsqrt.pop %v386
        %v388 = vmul.f32 %v387, %v386
        %v389 = vmul.f32 %v388, %v387
        %v390 = vmul.f32 0.5, %v389
        %v391 = vsub.f32 1.5, %v390
        %v392 = vmul.f32 %v387, %v391
        %vm393 = vweird.f32 %v386
        %vm394 = vweird.f32 %v387
        %vm395 = vmor %vm393, %vm394
        %v396 = vsel %vm395, %v387, %v392
        %v397 = vmul.f32 %v380, %v396
        %v398 = vld [vmem:[#allocation5] sm:$0x1]
        %v400 = vperm.slane %v398, 0
        %v402 = vmul.f32 %v397, %v400
        %v403 = vld [vmem:[%s2] sm:$0x1]
        %v405 = vperm.slane %v403, 0
        %v407 = vadd.f32 %v402, %v405
        %v408 = vpack.c.bf16 %v407, %v407
        %v409 = vld [vmem:[#allocation7] sm:$0xf]
        %v410 = vld [vmem:[#allocation7 + $0x4] sm:$0xf]
        %v411 = vld [vmem:[#allocation7 + $0x8] sm:$0xf]
        %v412 = vld [vmem:[#allocation7 + $0xc] sm:$0xf]
        %v413 = vld [vmem:[%s4] sm:$0x1]
        %v415 = vperm.slane %v413, 0
        %v421 = vunpack.c.l.b16 %v409
        %v422 = vunpack.c.l.b16 %v410
        %v423 = vunpack.c.l.b16 %v411
        %v424 = vunpack.c.l.b16 %v412
        %v425 = vpack.c.b16 %v422, %v421
        %v426 = vpack.c.b16 %v424, %v423
        %v430 = vsel %vm368, %v408, 0
        %432 = vmatpush.bf16.msra.mxu0 0
        %433 = vmatpush.bf16.msra.mxu0 0
        %434 = vmatpush.bf16.msra.mxu0 0
        %435 = vmatpush.bf16.msra.mxu0 0
        %436 = vmatpush.bf16.msra.mxu0 0
        %437 = vmatpush.bf16.msra.mxu0 0
        %438 = vmatpush.bf16.msra.mxu0 %v426
        %439 = vmatpush.bf16.msra.mxu0 %v425
        %440 = vmatmul.bf16.gmra.mxu0 %v430
        %v441 = vpop.f32.mrf.mxu0
        %v442 = vadd.f32 %v415, %v441
        %v443 = vpop.f32.mrf.mxu0
        %444 = vdwg.mxu0
        %v445 = vpack.c.bf16 %v442, %v442
        %vm446 = vcmask 60416
        %447 = vst.msk [vmem:[%s351] sm:$0xf] %vm446, %v445
        %449 = vrot.lane.b32.xlu0 %v445, 120
        %v450 = vpop.permute.xlu0 %449
        %s452 = scalar_lea.vmem %s351, 4 [#allocation8]
        %453 = vst.msk [vmem:[%s452] sm:$0xf] %vm446, %v450
        %454 = vrot.lane.b32.xlu0 %v445, 112
        %v455 = vpop.permute.xlu0 %454
        %s457 = scalar_lea.vmem %s351, 8 [#allocation8]
        %458 = vst.msk [vmem:[%s457] sm:$0xf] %vm446, %v455
        %459 = vrot.lane.b32.xlu0 %v445, 104
        %v460 = vpop.permute.xlu0 %459
        %s462 = scalar_lea.vmem %s351, 12 [#allocation8]
        %463 = vst.msk [vmem:[%s462] sm:$0xf] %vm446, %v460
        %464 = vrot.lane.b32.xlu0 %v445, 96
        %v465 = vpop.permute.xlu0 %464
        %467 = vst.msk [vmem:[%s358] sm:$0xf] %vm446, %v465
        %468 = vrot.lane.b32.xlu0 %v445, 88
        %v469 = vpop.permute.xlu0 %468
        %s471 = scalar_lea.vmem %s358, 4 [#allocation9]
        %472 = vst.msk [vmem:[%s471] sm:$0xf] %vm446, %v469
        %473 = vrot.lane.b32.xlu0 %v445, 80
        %v474 = vpop.permute.xlu0 %473
        %s476 = scalar_lea.vmem %s358, 8 [#allocation9]
        %477 = vst.msk [vmem:[%s476] sm:$0xf] %vm446, %v474
        %478 = vrot.lane.b32.xlu0 %v445, 72
        %v479 = vpop.permute.xlu0 %478
        %s481 = scalar_lea.vmem %s358, 12 [#allocation9]
        %482 = vst.msk [vmem:[%s481] sm:$0xf] %vm446, %v479
        %483 = vrot.lane.b32.xlu0 %v445, 64
        %v484 = vpop.permute.xlu0 %483
        %486 = vst.msk [vmem:[%s365] sm:$0xf] %vm446, %v484
        %487 = vrot.lane.b32.xlu0 %v445, 56
        %v488 = vpop.permute.xlu0 %487
        %s490 = scalar_lea.vmem %s365, 4 [#allocation11]
        %491 = vst.msk [vmem:[%s490] sm:$0xf] %vm446, %v488
        %492 = vrot.lane.b32.xlu0 %v445, 48
        %v493 = vpop.permute.xlu0 %492
        %s495 = scalar_lea.vmem %s365, 8 [#allocation11]
        %496 = vst.msk [vmem:[%s495] sm:$0xf] %vm446, %v493
        %497 = vrot.lane.b32.xlu0 %v445, 40
        %v498 = vpop.permute.xlu0 %497
        %s500 = scalar_lea.vmem %s365, 12 [#allocation11]
        %501 = vst.msk [vmem:[%s500] sm:$0xf] %vm446, %v498
        %s502 = sand.u32 %s163, 1
        %s503 = scalar_lea.sflag [#allocation4], %s502
        %s504 = sand.u32 %s163, 1
        %s505 = smul.addr %s504, 16
        %s506 = scalar_lea.vmem [#allocation8], %s505
        %s507 = sand.u32 %s29, 1
        %s508 = scalar_lea.sflag [#allocation10], %s507
        %s509 = sand.u32 %s191, 1
        %s510 = smul.addr %s509, 16
        %s511 = scalar_lea.vmem [#allocation9], %s510
        %s512 = sand.u32 %s29, 1
        %s513 = scalar_lea.sflag [#allocation10], %s512
        %s514 = sand.u32 %s219, 1
        %s515 = smul.addr %s514, 16
        %s516 = scalar_lea.vmem [#allocation11], %s515
        // Predicated region
        $region53: #{tpu_custom_call.1} parent=39 // pred_check
          %p517 = pneg %p173
        $region54: #{tpu_custom_call.1} parent=39 // pred_check_branch
          %519 = sbr.rel (%p517) target = $region56
        $region55: #{tpu_custom_call.1} parent=39 // pred_region
          %521 = vsyncadd %s503, 0
          %s522 = smul.addr %s33, 4
          %s523 = sadd.s32 %s34, %s522
          %s524 = smul.addr %s523, 4
          %s525 = scalar_lea.hbm %s5, %s524
          %s526 = sshll.u32 %s506, 4
          %s527 = int_to_ptr.vmem [resolvable:$true] %s526
          %s528 = sshll.u32 %s525, 4
          %s529 = int_to_ptr.hbm [resolvable:$true] %s528
          %534 = dma.vmem_to_hbm [thread:$0]  %s527, 256, %s529, %s503, 64, 64, 4
        $region56: #{tpu_custom_call.1} parent=39 // pred_fallthru
          _
        // Predicated region
        $region57: #{tpu_custom_call.1} parent=39 // pred_check
          %p535 = pneg %p201
        $region58: #{tpu_custom_call.1} parent=39 // pred_check_branch
          %537 = sbr.rel (%p535) target = $region60
        $region59: #{tpu_custom_call.1} parent=39 // pred_region
          %539 = vsyncadd %s508, 0
          %s540 = smul.addr %s33, 4
          %s541 = sadd.s32 %s34, %s540
          %s542 = smul.addr %s541, 4
          %s543 = scalar_lea.hbm %s6, %s542
          %s544 = sshll.u32 %s511, 4
          %s545 = int_to_ptr.vmem [resolvable:$true] %s544
          %s546 = sshll.u32 %s543, 4
          %s547 = int_to_ptr.hbm [resolvable:$true] %s546
          %552 = dma.vmem_to_hbm [thread:$0]  %s545, 256, %s547, %s508, 64, 64, 4
        $region60: #{tpu_custom_call.1} parent=39 // pred_fallthru
          _
        // Predicated region
        $region61: #{tpu_custom_call.1} parent=39 // pred_check
          %p553 = pneg %p229
        $region62: #{tpu_custom_call.1} parent=39 // pred_check_branch
          %555 = sbr.rel (%p553) target = $region64
        $region63: #{tpu_custom_call.1} parent=39 // pred_region
          %557 = vsyncadd %s513, 0
          %s558 = smul.addr %s33, 4
          %s559 = sadd.s32 %s34, %s558
          %s560 = smul.addr %s559, 4
          %s561 = scalar_lea.hbm %s7, %s560
          %s562 = sshll.u32 %s516, 4
          %s563 = int_to_ptr.vmem [resolvable:$true] %s562
          %s564 = sshll.u32 %s561, 4
          %s565 = int_to_ptr.hbm [resolvable:$true] %s564
          %570 = dma.vmem_to_hbm [thread:$0]  %s563, 256, %s565, %s513, 64, 64, 4
        $region64: #{tpu_custom_call.1} parent=39 // pred_fallthru
          _
      $region40: #{tpu_custom_call.1} parent=5 // pred_fallthru
        _
      %p571 = scmp.le.s32.totalorder 2, %s24
      // Predicated region
      $region65: #{tpu_custom_call.1} parent=5 // pred_check
        %p572 = pneg %p571
      $region66: #{tpu_custom_call.1} parent=5 // pred_check_branch
        %574 = sbr.rel (%p572) target = $region68
      $region67: #{tpu_custom_call.1} parent=5 // pred_region
        %s575 = ssub.s32 %s24, 2
        // Predicated region
        $region69: #{tpu_custom_call.1} parent=67 // pred_check
          %p576 = pneg %p179
        $region70: #{tpu_custom_call.1} parent=67 // pred_check_branch
          %578 = sbr.rel (%p576) target = $region72
        $region71: #{tpu_custom_call.1} parent=67 // pred_region
          %s579 = sand.u32 %s164, 1
          %s580 = scalar_lea.sflag [#allocation4], %s579
          %s581 = sand.u32 %s164, 1
          %s582 = smul.addr %s581, 16
          %s583 = scalar_lea.vmem [#allocation8], %s582
          %585 = dma.done %s580, 256
        $region72: #{tpu_custom_call.1} parent=67 // pred_fallthru
          _
        // Predicated region
        $region73: #{tpu_custom_call.1} parent=67 // pred_check
          %p586 = pneg %p207
        $region74: #{tpu_custom_call.1} parent=67 // pred_check_branch
          %588 = sbr.rel (%p586) target = $region76
        $region75: #{tpu_custom_call.1} parent=67 // pred_region
          %s589 = sand.u32 %s30, 1
          %s590 = scalar_lea.sflag [#allocation10], %s589
          %s591 = sand.u32 %s192, 1
          %s592 = smul.addr %s591, 16
          %s593 = scalar_lea.vmem [#allocation9], %s592
          %595 = dma.done %s590, 256
        $region76: #{tpu_custom_call.1} parent=67 // pred_fallthru
          _
        // Predicated region
        $region77: #{tpu_custom_call.1} parent=67 // pred_check
          %p596 = pneg %p235
        $region78: #{tpu_custom_call.1} parent=67 // pred_check_branch
          %598 = sbr.rel (%p596) target = $region80
        $region79: #{tpu_custom_call.1} parent=67 // pred_region
          %s599 = sand.u32 %s30, 1
          %s600 = scalar_lea.sflag [#allocation10], %s599
          %s601 = sand.u32 %s220, 1
          %s602 = smul.addr %s601, 16
          %s603 = scalar_lea.vmem [#allocation11], %s602
          %605 = dma.done %s600, 256
        $region80: #{tpu_custom_call.1} parent=67 // pred_fallthru
          _
      $region68: #{tpu_custom_call.1} parent=5 // pred_fallthru
        _
    $region6: #{tpu_custom_call.1} parent=1 // loop_footer
      %s28 = sadd.s32 1, %s24
    $region7: #{tpu_custom_call.1} parent=1 // loop_footer_branch
      %23 = sbr.rel target = $region3
    $region8: #{tpu_custom_call.1} parent=1 // loop_exit
      _
    %606 = vsyncpa [#allocation3], 1
    %s607 = scalar_lea.sflag [#allocation3], 1
    %608 = vsyncpa %s607, 1
    %609 = vsyncpa [#allocation6], 1
    %610 = vsyncpa [#allocation4], 1
    %s611 = scalar_lea.sflag [#allocation4], 1
    %612 = vsyncpa %s611, 1
    %613 = vsyncpa [#allocation10], 1
    %s614 = scalar_lea.sflag [#allocation10], 1
    %615 = vsyncpa %s614, 1

</llo_original>
